<compile_context>
chip_gen: v7x
topology: tpu7x:2x2x1
jax: 0.10.0
libtpu: 0.0.40
codegen_flags: <defaults>
</compile_context>

<pallas_src>
import jax
import jax.numpy as jnp
from jax.experimental import pallas as pl
from jax.experimental.pallas import tpu as pltpu


def linear_kernel(w_ref, b_ref, x_ref, o_ref):
    # w_ref: (1,) f32 in SMEM, b_ref: (1,) f32 in SMEM, x_ref/o_ref: (1, N) f32 in VMEM.
    w = w_ref[0]                       # scalar weight (Linear(1,1) has a single weight)
    b = b_ref[0]                       # scalar bias
    o_ref[...] = x_ref[...] * w + b    # one VPU multiply-add on a dense lane row


def linear_pallas(x, w, b):
    """x: (N, 1) f32, w: (1, 1) f32 (torch (out,in) layout), b: (1,) f32 -> (N, 1) f32."""
    n, in_f = x.shape
    out_f = w.shape[0]
    assert in_f == 1 and out_f == 1, "kernel specialized for Linear(1, 1)"

    # Layout plumbing outside the kernel: lane-dense x, scalar params.
    x_row = x.reshape(1, n)            # batch on lanes
    w_s = w.reshape(-1)                # (1,)
    b_s = b.reshape(-1)                # (1,)

    out_row = pl.pallas_call(
        linear_kernel,
        out_shape=jax.ShapeDtypeStruct((1, n), x.dtype),
        in_specs=[
            pl.BlockSpec(memory_space=pltpu.MemorySpace.SMEM),   # w scalar
            pl.BlockSpec(memory_space=pltpu.MemorySpace.SMEM),   # b scalar
            pl.BlockSpec(memory_space=pltpu.MemorySpace.VMEM),   # x, full (1, N) block
        ],
        out_specs=pl.BlockSpec(memory_space=pltpu.MemorySpace.VMEM),
    )(w_s, b_s, x_row)

    return out_row.reshape(n, out_f)


if __name__ == "__main__":
    key = jax.random.PRNGKey(0)
    kx, kw, kb = jax.random.split(key, 3)

    # Small shapes consistent with Linear(1, 1): batch=8, features=1.
    N, IN_F, OUT_F = 8, 1, 1
    x = jax.random.normal(kx, (N, IN_F), dtype=jnp.float32)

    # Deterministic parameter init (mimics nn.Linear's uniform(-1/sqrt(in), 1/sqrt(in))).
    bound = 1.0 / (IN_F ** 0.5)
    w = jax.random.uniform(kw, (OUT_F, IN_F), minval=-bound, maxval=bound,
                           dtype=jnp.float32)
    b = jax.random.uniform(kb, (OUT_F,), minval=-bound, maxval=bound,
                           dtype=jnp.float32)

    out = linear_pallas(x, w, b)
    jax.block_until_ready(out)

    # Reference check against plain JAX linear.
    ref = x @ w.T + b
    assert out.shape == (N, OUT_F)
    assert jnp.allclose(out, ref, atol=1e-5, rtol=1e-5)

    print("KERNEL_OK")
</pallas_src>

<mosaic_0001>
module attributes {stable_mosaic.version = 11 : i64} {
  func.func @linear_kernel(%arg0: memref<1xf32, #tpu.memory_space<smem>>, %arg1: memref<1xf32, #tpu.memory_space<smem>>, %arg2: memref<1x8xf32, #tpu.memory_space<vmem>>, %arg3: memref<1x8xf32, #tpu.memory_space<vmem>>) attributes {dimension_semantics = [], scalar_prefetch = 0 : i64, scratch_operands = 0 : i64, tpu.core_type = #tpu.core_type<tc>} {
    %c0 = arith.constant 0 : index
    %0 = memref.load %arg0[%c0] : memref<1xf32, #tpu.memory_space<smem>>
    %c0_0 = arith.constant 0 : index
    %1 = memref.load %arg1[%c0_0] : memref<1xf32, #tpu.memory_space<smem>>
    %c0_1 = arith.constant 0 : index
    %c0_2 = arith.constant 0 : index
    %2 = vector.load %arg2[%c0_1, %c0_2] : memref<1x8xf32, #tpu.memory_space<vmem>>, vector<1x8xf32>
    %3 = vector.broadcast %0 : f32 to vector<1x8xf32>
    %4 = arith.mulf %2, %3 : vector<1x8xf32>
    %5 = vector.broadcast %1 : f32 to vector<1x8xf32>
    %6 = arith.addf %4, %5 : vector<1x8xf32>
    %c0_3 = arith.constant 0 : index
    %c0_4 = arith.constant 0 : index
    %7 = vector.load %arg3[%c0_3, %c0_4] : memref<1x8xf32, #tpu.memory_space<vmem>>, vector<1x8xf32>
    tpu.vector_store %arg3[%c0_3, %c0_4], %6 {strides = array<i32>} : memref<1x8xf32, #tpu.memory_space<vmem>>, vector<1x8xf32>,
    return
  }
}

</mosaic_0001>

<llo_original>
// kernel: tpu_custom_call.1
$region0: #{tpu_custom_call.1}
  #allocation0 [shape = 'u32[]', space=smem, size = 0x4, offset = 0x4, fixed_abs, tag = 'smem constant byte address 0x4 - core index']
  #allocation1 [shape = 'u32[144,128]{1,0:T(1,128)}', space=vmem, size = 0x12000, scoped, tag = 'internal scratch']
  #allocation2 [shape = 'f32[1]{0:T(128)S(6)}', space=smem, size = 0x200, scoped, tag = 'scoped memory for tpu_custom_call.1']
  #allocation3 [shape = 'f32[1]{0:T(128)S(6)}', space=smem, size = 0x200, scoped, tag = 'scoped memory for tpu_custom_call.1']
  %s0 = inlined_call_operand.<no memory space> [shape: f32[1], index: 0, kind: input, shape index: {}]
  %s1 = inlined_call_operand.<no memory space> [shape: f32[1], index: 1, kind: input, shape index: {}]
  %s2 = inlined_call_operand.vmem [shape: f32[1,8], index: 2, kind: input, shape index: {}]
  %s3 = inlined_call_operand.hbm [shape: f32[1,8], index: 3, kind: output, shape index: {}]
  %s4 = sld [smem:[#allocation0]]
  $region22: #{tpu_custom_call.1} parent=0
    _
  %s6 = ssub.s32 1, %s4
  %s7 = scalar_select 0, %s6, %s4
  %8 = sst [smem:[#allocation2]] %s0
  %9 = sst [smem:[#allocation3]] %s1
  $region1: #{tpu_custom_call.1} parent=0
    #allocation4 [shape = 'u8[512]{0}', space=vmem, size = 0x400, scoped, tag = 'output window, operand 0, single buffered']
    #allocation5 [shape = 's32[1]{0}', space=sflag, size = 0x4, scoped, tag = 'scoped memory for tpu_custom_call.1']
    %10 = vsyncpa [#allocation5], 0
    // Predicated region
    $region2: #{tpu_custom_call.1} parent=1 // pred_check
      _
    $region3: #{tpu_custom_call.1} parent=1 // pred_check_branch
      %12 = sbr.rel (0) target = $region5
    $region4: #{tpu_custom_call.1} parent=1 // pred_region
      _
    $region5: #{tpu_custom_call.1} parent=1 // pred_fallthru
      _
    // Predicated region
    $region6: #{tpu_custom_call.1} parent=1 // pred_check
      _
    $region7: #{tpu_custom_call.1} parent=1 // pred_check_branch
      %14 = sbr.rel (0) target = $region9
    $region8: #{tpu_custom_call.1} parent=1 // pred_region
      _
    $region9: #{tpu_custom_call.1} parent=1 // pred_fallthru
      _
    // Predicated region
    $region10: #{tpu_custom_call.1} parent=1 // pred_check
      _
    $region11: #{tpu_custom_call.1} parent=1 // pred_check_branch
      %16 = sbr.rel (0) target = $region13
    $region12: #{tpu_custom_call.1} parent=1 // pred_region
      _
    $region13: #{tpu_custom_call.1} parent=1 // pred_fallthru
      _
    %s17 = sld [smem:[#allocation2]]
    %s18 = sld [smem:[#allocation3]]
    %v19 = vld [vmem:[%s2] sm:$0x1]
    %v20 = vstv %s17
    %v21 = vmul.f32 %v19, %v20
    %v22 = vstv %s18
    %v23 = vadd.f32 %v21, %v22
    %vm24 = vcmask 57344
    %25 = vst.msk [vmem:[#allocation4] sm:$0x1] %vm24, %v23
    // Predicated region
    $region14: #{tpu_custom_call.1} parent=1 // pred_check
      _
    $region15: #{tpu_custom_call.1} parent=1 // pred_check_branch
      %27 = sbr.rel (0) target = $region17
    $region16: #{tpu_custom_call.1} parent=1 // pred_region
      %s29 = ssub.s32 16, 16
      %30 = vsyncadd [#allocation5], %s29
      %s32 = sshll.u32 [#allocation4], 4
      %s33 = int_to_ptr.vmem [resolvable:$true] %s32
      %35 = dma.vmem_to_hbm [thread:$0]  %s33, 16, %s3, [#allocation5]
    $region17: #{tpu_custom_call.1} parent=1 // pred_fallthru
      _
    // Predicated region
    $region18: #{tpu_custom_call.1} parent=1 // pred_check
      _
    $region19: #{tpu_custom_call.1} parent=1 // pred_check_branch
      %37 = sbr.rel (0) target = $region21
    $region20: #{tpu_custom_call.1} parent=1 // pred_region
      %38 = dma.done [#allocation5], 16
    $region21: #{tpu_custom_call.1} parent=1 // pred_fallthru
      _
    %39 = vsyncpa [#allocation5], 1

</llo_original>
